<compile_context>
chip_gen: v5e
topology: v5e:2x2
jax: 0.10.0
libtpu: 0.0.40
codegen_flags: <defaults>
</compile_context>

<pallas_src>
import functools

import jax
import jax.numpy as jnp
from jax import lax
from jax.experimental import pallas as pl
from jax.experimental.pallas import tpu as pltpu


def _cdiv(a: int, b: int) -> int:
    return -(-a // b)


def _interp_matrix(in_size: int, out_size: int, mode: str) -> jnp.ndarray:
    """(out_size, in_size) 1-D interpolation matrix matching PyTorch."""
    i = jnp.arange(out_size, dtype=jnp.float32)
    if mode == "nearest":
        # PyTorch legacy nearest: src = min(floor(dst * in/out), in - 1)
        src = jnp.minimum(
            jnp.floor(i * (in_size / out_size)).astype(jnp.int32), in_size - 1
        )
        return jax.nn.one_hot(src, in_size, dtype=jnp.float32)
    elif mode in ("bilinear", "linear"):
        # align_corners=False: src = max((dst + 0.5) * in/out - 0.5, 0)
        scale = in_size / out_size
        src = jnp.maximum((i + 0.5) * scale - 0.5, 0.0)
        i0 = jnp.floor(src).astype(jnp.int32)
        lam = src - i0.astype(jnp.float32)
        i1 = jnp.minimum(i0 + 1, in_size - 1)
        w0 = jax.nn.one_hot(i0, in_size, dtype=jnp.float32) * (1.0 - lam)[:, None]
        w1 = jax.nn.one_hot(i1, in_size, dtype=jnp.float32) * lam[:, None]
        return w0 + w1
    else:
        # TODO(synk): 'bicubic' / 'trilinear' modes not implemented.
        raise NotImplementedError(f"mode={mode!r} not supported")


def _vmem_limits():
    """Chip-aware (vmem_limit_bytes, per-step working-set budget)."""
    try:
        cap = int(pltpu.get_tpu_info().vmem_capacity_bytes)
    except Exception:
        cap = 64 * 1024 * 1024          # conservative fallback (v7x per-TC VMEM)
    # v5e/v6e (128 MiB): limit 96 MiB, budget 32 MiB.  v7x (64 MiB): 48 / 16 MiB.
    limit = min(96 * 1024 * 1024, (cap * 3) // 4)
    return int(limit), int(limit // 3)


def _choose_plane_batch(P, H_in, W_in, W_out, s, x_isz, scr_isz, w_isz,
                        replicate_h, budget):
    """Pick how many (n, c) planes to process per grid step."""
    # Resident per step: 2x input block + 2x output block + width-pass scratch
    # + (conservatively double-buffered) weight matrices.
    w_bytes = 2 * W_in * W_out * w_isz
    if not replicate_h:
        w_bytes += 2 * s * H_in * H_in * w_isz
    per_plane = (2 * H_in * W_in + 2 * H_in * s * W_out) * x_isz \
        + H_in * W_out * scr_isz
    b = max(1, (budget - w_bytes) // per_plane)
    b = int(min(b, 256, P))
    # >= 4 plane blocks so the v7x megacore ("parallel" grid axis) gets at
    # least 2 steps per TensorCore to pipeline; harmless on 1-TC chips.
    nblocks = max(_cdiv(P, b), min(P, 4))
    b = _cdiv(P, nblocks)
    return int(b), int(_cdiv(P, b))


def _const_weight_spec(block_shape, index_map, nbytes):
    """BlockSpec for a constant-index weight matrix.

    Large weights are single-buffered (they are only DMA'd once since their
    index map never changes); small ones keep the default, maximally
    compatible spec.
    """
    if nbytes >= 256 * 1024:
        return pl.BlockSpec(block_shape, index_map, pipeline_mode=pl.Buffered(1))
    return pl.BlockSpec(block_shape, index_map)


def _upsample_kernel(*refs, replicate_h: bool):
    """One grid step: upsample a batch of B (n, c) planes.

    refs = (x_ref, wwt_ref[, whp_ref], o_ref, y_ref)
      x_ref  : (B, H_in, W_in)        input planes
      wwt_ref: (W_in, W_out)          column interp matrix (pre-transposed)
      whp_ref: (s, H_in, H_in)        phase-sliced row interp matrices (bilinear)
      o_ref  : (B, H_in, s * W_out)   output, height-phase interleaved on lanes
      y_ref  : (B, H_in, W_out)       VMEM scratch holding the width-pass result
    """
    if replicate_h:
        x_ref, wwt_ref, o_ref, y_ref = refs
        whp_ref = None
    else:
        x_ref, wwt_ref, whp_ref, o_ref, y_ref = refs

    B, H_in, W_in = x_ref.shape
    W_out = y_ref.shape[-1]
    s = o_ref.shape[-1] // W_out
    wwt = wwt_ref[...]

    # ---- width pass (MXU): x @ wwt -> y scratch ---------------------------
    packing = 8 * (4 // jnp.dtype(x_ref.dtype).itemsize)   # f32:8 bf16:16 i8:32
    if H_in % packing == 0:
        # Tile-aligned flatten: one large matmul for the whole plane block.
        y = jnp.dot(x_ref[...].reshape(B * H_in, W_in), wwt,
                    preferred_element_type=jnp.float32)
        y_ref[...] = y.astype(y_ref.dtype).reshape(B, H_in, W_out)
    else:
        # Layout-unfriendly H_in: per-plane matmuls, rolled loop.
        def wbody(b, carry):
            y_ref[b] = jnp.dot(x_ref[b], wwt,
                               preferred_element_type=jnp.float32
                               ).astype(y_ref.dtype)
            return carry

        lax.fori_loop(0, B, wbody, 0)

    # ---- height pass: rolled per-plane loop (bounded vreg live ranges) ----
    def hbody(b, carry):
        yb = y_ref[b]                                        # (H_in, W_out)
        if replicate_h:
            # nearest: pure row replication -- no MXU, no dense W_h.
            parts = [yb] * s
        else:
            parts = [jnp.dot(whp_ref[jh], yb,
                             preferred_element_type=jnp.float32)
                     for jh in range(s)]
        o_ref[b] = jnp.concatenate(parts, axis=-1).astype(o_ref.dtype)
        return carry

    lax.fori_loop(0, B, hbody, 0)


@functools.partial(jax.jit, static_argnames=("downscale_factor", "mode"))
def upsample(x: jnp.ndarray, downscale_factor: int, mode: str) -> jnp.ndarray:
    """Pallas equivalent of Upsample(downscale_factor, mode).forward(x) (NCHW)."""
    N, C, H_in, W_in = x.shape
    s = int(downscale_factor)
    H_out, W_out = H_in * s, W_in * s
    P = N * C

    if mode not in ("nearest", "bilinear", "linear"):
        raise NotImplementedError(f"mode={mode!r} not supported")
    replicate_h = mode == "nearest"

    # bf16 inputs -> bf16 weights (full-rate MXU); otherwise f32.  Accumulation
    # is always f32.  (For non-power-of-two bilinear scales the bf16 taps are
    # inexact; acceptable only because the input is already bf16.)
    w_dtype = jnp.bfloat16 if x.dtype == jnp.bfloat16 else jnp.float32
    scr_dtype = w_dtype

    wwt = _interp_matrix(W_in, W_out, mode).T.astype(w_dtype)       # (W_in, W_out)
    args = [x.reshape(P, H_in, W_in), wwt]

    x_isz = jnp.dtype(x.dtype).itemsize
    w_isz = jnp.dtype(w_dtype).itemsize
    scr_isz = jnp.dtype(scr_dtype).itemsize

    vmem_limit, budget = _vmem_limits()
    B, nblocks = _choose_plane_batch(P, H_in, W_in, W_out, s, x_isz, scr_isz,
                                     w_isz, replicate_h, budget)

    in_specs = [
        pl.BlockSpec((B, H_in, W_in), lambda i: (i, 0, 0)),
        _const_weight_spec((W_in, W_out), lambda i: (0, 0),
                           W_in * W_out * w_isz),
    ]
    if not replicate_h:
        wh = _interp_matrix(H_in, H_out, mode).astype(w_dtype)      # (H_out, H_in)
        # Phase-sliced row matrices: whp[jh][h, k] = wh[h*s + jh, k]
        whp = wh.reshape(H_in, s, H_in).transpose(1, 0, 2)          # (s, H_in, H_in)
        args.append(whp)
        in_specs.append(_const_weight_spec((s, H_in, H_in),
                                           lambda i: (0, 0, 0),
                                           s * H_in * H_in * w_isz))

    # Output is stored height-phase-interleaved along lanes: (P, H_in, s*W_out)
    # has exactly the same row-major layout as (P, H_out, W_out), so the final
    # reshape below is metadata-only.  All block specs keep full trailing dims.
    out_specs = pl.BlockSpec((B, H_in, s * W_out), lambda i: (i, 0, 0))

    flops = 2 * P * H_in * W_in * W_out
    if not replicate_h:
        flops += 2 * P * s * H_in * H_in * W_out
    bytes_accessed = P * (H_in * W_in + H_out * W_out) * x_isz

    out = pl.pallas_call(
        functools.partial(_upsample_kernel, replicate_h=replicate_h),
        out_shape=jax.ShapeDtypeStruct((P, H_in, s * W_out), x.dtype),
        grid_spec=pltpu.PrefetchScalarGridSpec(
            num_scalar_prefetch=0,
            grid=(nblocks,),
            in_specs=in_specs,
            out_specs=out_specs,
            scratch_shapes=[pltpu.VMEM((B, H_in, W_out), scr_dtype)],
        ),
        compiler_params=pltpu.CompilerParams(
            dimension_semantics=("parallel",),
            vmem_limit_bytes=int(vmem_limit),
        ),
        cost_estimate=pl.CostEstimate(flops=int(flops),
                                      transcendentals=0,
                                      bytes_accessed=int(bytes_accessed)),
    )(*args)

    return out.reshape(N, C, H_out, W_out)


def _reference(x: jnp.ndarray, s: int, mode: str) -> jnp.ndarray:
    """Pure-JAX reference using the same separable formulation (f32)."""
    _, _, H, W = x.shape
    wh = _interp_matrix(H, H * s, mode)
    ww = _interp_matrix(W, W * s, mode)
    return jnp.einsum("oh,nchw,pw->ncop", wh, x.astype(jnp.float32), ww)


if __name__ == "__main__":
    key0, key1 = jax.random.split(jax.random.PRNGKey(0))

    # 1) bilinear, f32, 16x16 -> 32x32 (the module's typical config)
    x = jax.random.normal(key0, (2, 4, 16, 16), dtype=jnp.float32)
    out = jax.block_until_ready(upsample(x, 2, "bilinear"))
    ref = _reference(x, 2, "bilinear")
    assert out.shape == (2, 4, 32, 32)
    assert jnp.allclose(out, ref, atol=1e-5, rtol=1e-5), "bilinear mismatch"

    # 2) nearest, f32 (replication path, exact)
    out_n = jax.block_until_ready(upsample(x, 2, "nearest"))
    ref_n = _reference(x, 2, "nearest")
    assert jnp.allclose(out_n, ref_n, atol=1e-5, rtol=1e-5), "nearest mismatch"

    # 3) bilinear, H/W not multiples of 8, scale factor 3
    x3 = jax.random.normal(key1, (1, 4, 12, 12), dtype=jnp.float32)
    out3 = jax.block_until_ready(upsample(x3, 3, "bilinear"))
    ref3 = _reference(x3, 3, "bilinear")
    assert out3.shape == (1, 4, 36, 36)
    assert jnp.allclose(out3, ref3, atol=1e-5, rtol=1e-5), "12x12 mismatch"

    # 4) bilinear, bf16 input (loose tolerance vs f32 reference)
    xb = x.astype(jnp.bfloat16)
    outb = jax.block_until_ready(upsample(xb, 2, "bilinear"))
    refb = _reference(xb.astype(jnp.float32), 2, "bilinear")
    assert outb.dtype == jnp.bfloat16
    assert jnp.allclose(outb.astype(jnp.float32), refb, atol=1e-1, rtol=5e-2), \
        "bf16 mismatch"

    print("KERNEL_OK")
</pallas_src>

<mosaic_0001>
module attributes {stable_mosaic.version = 11 : i64} {
  func.func @_upsample_kernel(%arg0: i32, %arg1: memref<2x16x16xf32, #tpu.memory_space<vmem>>, %arg2: memref<16x32xf32, #tpu.memory_space<vmem>>, %arg3: memref<2x16x16xf32, #tpu.memory_space<vmem>>, %arg4: memref<2x16x64xf32, #tpu.memory_space<vmem>>, %arg5: memref<2x16x32xf32, #tpu.memory_space<vmem>>) attributes {dimension_semantics = [#tpu.dimension_semantics<parallel>], iteration_bounds = array<i64: 4>, scalar_prefetch = 0 : i64, scratch_operands = 1 : i64, tpu.core_type = #tpu.core_type<tc>, window_params = [{transform_indices = @transform_0, window_bounds = array<i64: 2, 16, 16>}, {pipeline_mode = #tpu.pipeline_mode<synchronous>, transform_indices = @transform_1, window_bounds = array<i64: 16, 32>}, {pipeline_mode = #tpu.pipeline_mode<synchronous>, transform_indices = @transform_2, window_bounds = array<i64: 2, 16, 16>}, {transform_indices = @transform_3, window_bounds = array<i64: 2, 16, 64>}]} {
    %c0 = arith.constant 0 : index
    %c0_0 = arith.constant 0 : index
    %0 = vector.load %arg2[%c0, %c0_0] : memref<16x32xf32, #tpu.memory_space<vmem>>, vector<16x32xf32>
    %c0_1 = arith.constant 0 : index
    %c0_2 = arith.constant 0 : index
    %c0_3 = arith.constant 0 : index
    %1 = vector.load %arg1[%c0_1, %c0_2, %c0_3] : memref<2x16x16xf32, #tpu.memory_space<vmem>>, vector<2x16x16xf32>
    %2 = vector.shape_cast %1 : vector<2x16x16xf32> to vector<32x16xf32>
    %cst = arith.constant dense<0.000000e+00> : vector<32x32xf32>
    %3 = tpu.matmul %2, %0, %cst {dimension_numbers = #tpu.dot_dimension_numbers<[1], [0], [0], [1], [0, 0, 1, 1], [], []>} : vector<32x16xf32>, vector<16x32xf32>, vector<32x32xf32> -> vector<32x32xf32>
    %4 = vector.shape_cast %3 : vector<32x32xf32> to vector<2x16x32xf32>
    %c0_4 = arith.constant 0 : index
    %c0_5 = arith.constant 0 : index
    %c0_6 = arith.constant 0 : index
    %5 = vector.load %arg5[%c0_4, %c0_5, %c0_6] : memref<2x16x32xf32, #tpu.memory_space<vmem>>, vector<2x16x32xf32>
    tpu.vector_store %arg5[%c0_4, %c0_5, %c0_6], %4 {strides = array<i32>} : memref<2x16x32xf32, #tpu.memory_space<vmem>>, vector<2x16x32xf32>,
    %c0_i32 = arith.constant 0 : i32
    %c2_i32 = arith.constant 2 : i32
    %6 = arith.addi %c0_i32, %c2_i32 : i32
    %c1_i32 = arith.constant 1 : i32
    scf.for %arg6 = %c0_i32 to %6 step %c1_i32  : i32 {
      %7 = arith.index_cast %arg6 : i32 to index
      %c0_8 = arith.constant 0 : index
      %c0_9 = arith.constant 0 : index
      %8 = vector.load %arg5[%7, %c0_8, %c0_9] : memref<2x16x32xf32, #tpu.memory_space<vmem>>, vector<1x16x32xf32>
      %9 = vector.shape_cast %8 : vector<1x16x32xf32> to vector<16x32xf32>
      %c0_10 = arith.constant 0 : index
      %c0_11 = arith.constant 0 : index
      %c0_12 = arith.constant 0 : index
      %10 = vector.load %arg3[%c0_10, %c0_11, %c0_12] : memref<2x16x16xf32, #tpu.memory_space<vmem>>, vector<1x16x16xf32>
      %11 = vector.shape_cast %10 : vector<1x16x16xf32> to vector<16x16xf32>
      %cst_13 = arith.constant dense<0.000000e+00> : vector<16x32xf32>
      %12 = tpu.matmul %11, %9, %cst_13 {dimension_numbers = #tpu.dot_dimension_numbers<[1], [0], [0], [1], [0, 0, 1, 1], [], []>} : vector<16x16xf32>, vector<16x32xf32>, vector<16x32xf32> -> vector<16x32xf32>
      %c1 = arith.constant 1 : index
      %c0_14 = arith.constant 0 : index
      %c0_15 = arith.constant 0 : index
      %13 = vector.load %arg3[%c1, %c0_14, %c0_15] : memref<2x16x16xf32, #tpu.memory_space<vmem>>, vector<1x16x16xf32>
      %14 = vector.shape_cast %13 : vector<1x16x16xf32> to vector<16x16xf32>
      %cst_16 = arith.constant dense<0.000000e+00> : vector<16x32xf32>
      %15 = tpu.matmul %14, %9, %cst_16 {dimension_numbers = #tpu.dot_dimension_numbers<[1], [0], [0], [1], [0, 0, 1, 1], [], []>} : vector<16x16xf32>, vector<16x32xf32>, vector<16x32xf32> -> vector<16x32xf32>
      %16 = tpu.concatenate %12, %15 in 1 : vector<16x32xf32>, vector<16x32xf32> -> vector<16x64xf32>
      %17 = arith.index_cast %arg6 : i32 to index
      %c0_17 = arith.constant 0 : index
      %c0_18 = arith.constant 0 : index
      %18 = vector.load %arg4[%17, %c0_17, %c0_18] : memref<2x16x64xf32, #tpu.memory_space<vmem>>, vector<1x16x64xf32>
      %19 = vector.shape_cast %18 : vector<1x16x64xf32> to vector<16x64xf32>
      %20 = vector.shape_cast %16 : vector<16x64xf32> to vector<1x16x64xf32>
      tpu.vector_store %arg4[%17, %c0_17, %c0_18], %20 {strides = array<i32>} : memref<2x16x64xf32, #tpu.memory_space<vmem>>, vector<1x16x64xf32>,
    }
    %c2_i32_7 = arith.constant 2 : i32
    return
  }
  func.func @transform_0(%arg0: i32) -> (i32, i32, i32) {
    %c0_i32 = arith.constant 0 : i32
    %c0_i32_0 = arith.constant 0 : i32
    %c0_i32_1 = arith.constant 0 : i32
    return %arg0, %c0_i32, %c0_i32_0 : i32, i32, i32
  }
  func.func @transform_1(%arg0: i32) -> (i32, i32) {
    %c0_i32 = arith.constant 0 : i32
    %c0_i32_0 = arith.constant 0 : i32
    %c0_i32_1 = arith.constant 0 : i32
    return %c0_i32, %c0_i32_0 : i32, i32
  }
  func.func @transform_2(%arg0: i32) -> (i32, i32, i32) {
    %c0_i32 = arith.constant 0 : i32
    %c0_i32_0 = arith.constant 0 : i32
    %c0_i32_1 = arith.constant 0 : i32
    %c0_i32_2 = arith.constant 0 : i32
    return %c0_i32, %c0_i32_0, %c0_i32_1 : i32, i32, i32
  }
  func.func @transform_3(%arg0: i32) -> (i32, i32, i32) {
    %c0_i32 = arith.constant 0 : i32
    %c0_i32_0 = arith.constant 0 : i32
    %c0_i32_1 = arith.constant 0 : i32
    return %arg0, %c0_i32, %c0_i32_0 : i32, i32, i32
  }
}

</mosaic_0001>

<llo_original>
// kernel: upsample.1
$region0: #{upsample.1}
  #allocation0 [shape = 'u32[]', space=smem, size = 0x4, offset = 0x4, fixed_abs, tag = 'smem constant byte address 0x4 - core index']
  #allocation1 [shape = 'u32[72,128]{1,0:T(1,128)}', space=vmem, size = 0x9000, scoped, tag = 'internal scratch']
  #allocation2 [shape = 'f32[2,16,32]{2,1,0:T(8,128)}', space=vmem, size = 0x4000, scoped, tag = 'scratch operand']
  %s0 = inlined_call_operand.hbm [shape: f32[8,16,16], index: 0, kind: input, shape index: {}]
  %s1 = inlined_call_operand.vmem [shape: f32[16,32], index: 1, kind: input, shape index: {}]
  %s2 = inlined_call_operand.vmem [shape: f32[2,16,16], index: 2, kind: input, shape index: {}]
  %s3 = inlined_call_operand.vmem [shape: f32[8,16,64], index: 3, kind: output, shape index: {}]
  %s4 = sld [smem:[#allocation0]]
  $region56: #{upsample.1} parent=0
    _
  %s6 = ssub.s32 1, %s4
  %s7 = scalar_select 0, %s6, %s4
  $region1: #{upsample.1} parent=0
    #allocation3 [shape = 'u8[32768]{0}', space=vmem, size = 0x8000, scoped, tag = 'input window, operand 0']
    #allocation4 [shape = 's32[2]{0}', space=sflag, size = 0x8, scoped, tag = 'scoped memory for upsample.1']
    %8 = vsyncpa [#allocation4], 0
    %s9 = scalar_lea.sflag [#allocation4], 1
    %10 = vsyncpa %s9, 0
    loop: start=0, step=1, limit=6
    $region2: #{upsample.1} parent=1 // loop_pre_header
      _
    $region3: #{upsample.1} parent=1 // loop_header
      %s12 = sphi 0, %s16
      %p13 = scmp.ge.s32.totalorder %s12, 6
      %s22 = sphi 0, %s24
      %s25 = sphi 0, %s22
      %s26 = sphi 0, %s25
      %s42 = sphi 0, %s26
      %s46 = sphi 0, %s46
      %s48 = sphi 0, %s46
      %s49 = sphi 0, %s48
      %s63 = sphi 0, %s49
      %s67 = sphi 0, %s67
      %s69 = sphi 0, %s67
      %s70 = sphi 0, %s69
      %s84 = sphi 0, %s70
      %s90 = sphi 0, %s92
      %s93 = sphi 0, %s90
      %s94 = sphi 0, %s93
      %s110 = sphi 0, %s94
    $region4: #{upsample.1} parent=1 // loop_header_branch
      %15 = sbr.rel (%p13) target = $region8
    $region5: #{upsample.1} parent=1 // loop_body
      %s17 = ssub.s32 %s12, 1
      %s18 = ssub.s32 %s12, 2
      %s19 = sadd.s32 %s12, 1
      %s20 = ssub.s32 %s12, %s19
      %p21 = scmp.eq.s32.totalorder %s20, 0
      %s23 = sadd.s32 %s22, 1
      %s24 = scalar_select %p21, %s22, %s23
      %p27 = pneg %p21
      %p28 = scmp.eq.s32.totalorder %s12, 3
      %p29 = por %p27, %p28
      %p30 = scmp.ne.s32.totalorder %s22, %s25
      %p31 = scmp.eq.s32.totalorder %s12, 0
      %p32 = por %p30, %p31
      %p33 = scmp.ne.s32.totalorder %s22, %s25
      %p34 = scmp.eq.s32.totalorder %s17, 3
      %p35 = por %p33, %p34
      %p36 = scmp.ne.s32.totalorder %s25, %s26
      %p37 = scmp.eq.s32.totalorder %s17, 0
      %p38 = por %p36, %p37
      %p39 = scmp.ne.s32.totalorder %s25, %s26
      %p40 = scmp.eq.s32.totalorder %s18, 3
      %p41 = por %p39, %p40
      %p43 = scmp.ne.s32.totalorder %s26, %s42
      %p44 = scmp.eq.s32.totalorder %s18, 0
      %p45 = por %p43, %p44
      %s47 = sadd.s32 %s46, 1
      %p50 = scmp.eq.s32.totalorder %s12, 3
      %p51 = scmp.ne.s32.totalorder %s46, %s48
      %p52 = scmp.eq.s32.totalorder %s12, 0
      %p53 = por %p51, %p52
      %p54 = scmp.ne.s32.totalorder %s46, %s48
      %p55 = scmp.eq.s32.totalorder %s17, 3
      %p56 = por %p54, %p55
      %p57 = scmp.ne.s32.totalorder %s48, %s49
      %p58 = scmp.eq.s32.totalorder %s17, 0
      %p59 = por %p57, %p58
      %p60 = scmp.ne.s32.totalorder %s48, %s49
      %p61 = scmp.eq.s32.totalorder %s18, 3
      %p62 = por %p60, %p61
      %p64 = scmp.ne.s32.totalorder %s49, %s63
      %p65 = scmp.eq.s32.totalorder %s18, 0
      %p66 = por %p64, %p65
      %s68 = sadd.s32 %s67, 1
      %p71 = scmp.eq.s32.totalorder %s12, 3
      %p72 = scmp.ne.s32.totalorder %s67, %s69
      %p73 = scmp.eq.s32.totalorder %s12, 0
      %p74 = por %p72, %p73
      %p75 = scmp.ne.s32.totalorder %s67, %s69
      %p76 = scmp.eq.s32.totalorder %s17, 3
      %p77 = por %p75, %p76
      %p78 = scmp.ne.s32.totalorder %s69, %s70
      %p79 = scmp.eq.s32.totalorder %s17, 0
      %p80 = por %p78, %p79
      %p81 = scmp.ne.s32.totalorder %s69, %s70
      %p82 = scmp.eq.s32.totalorder %s18, 3
      %p83 = por %p81, %p82
      %p85 = scmp.ne.s32.totalorder %s70, %s84
      %p86 = scmp.eq.s32.totalorder %s18, 0
      %p87 = por %p85, %p86
      %s88 = ssub.s32 %s12, %s19
      %p89 = scmp.eq.s32.totalorder %s88, 0
      %s91 = sadd.s32 %s90, 1
      %s92 = scalar_select %p89, %s90, %s91
      %p95 = pneg %p89
      %p96 = scmp.eq.s32.totalorder %s12, 3
      %p97 = por %p95, %p96
      %p98 = scmp.ne.s32.totalorder %s90, %s93
      %p99 = scmp.eq.s32.totalorder %s12, 0
      %p100 = por %p98, %p99
      %p101 = scmp.ne.s32.totalorder %s90, %s93
      %p102 = scmp.eq.s32.totalorder %s17, 3
      %p103 = por %p101, %p102
      %p104 = scmp.ne.s32.totalorder %s93, %s94
      %p105 = scmp.eq.s32.totalorder %s17, 0
      %p106 = por %p104, %p105
      %p107 = scmp.ne.s32.totalorder %s93, %s94
      %p108 = scmp.eq.s32.totalorder %s18, 3
      %p109 = por %p107, %p108
      %p111 = scmp.ne.s32.totalorder %s94, %s110
      %p112 = scmp.eq.s32.totalorder %s18, 0
      %p113 = por %p111, %p112
      %p114 = scmp.le.s32.totalorder 1, %s12
      %p115 = scmp.lt.s32.totalorder %s12, 5
      %p116 = pnand %p114, %p115
      %p117 = pneg %p116
      // Predicated region
      $region9: #{upsample.1} parent=5 // pred_check
        _
      $region10: #{upsample.1} parent=5 // pred_check_branch
        %119 = sbr.rel (%p116) target = $region12
      $region11: #{upsample.1} parent=5 // pred_region
        %s120 = ssub.s32 %s12, 1
        // Predicated region
        $region13: #{upsample.1} parent=11 // pred_check
          %p121 = pneg %p59
        $region14: #{upsample.1} parent=11 // pred_check_branch
          %123 = sbr.rel (%p121) target = $region16
        $region15: #{upsample.1} parent=11 // pred_region
          _
        $region16: #{upsample.1} parent=11 // pred_fallthru
          _
        // Predicated region
        $region17: #{upsample.1} parent=11 // pred_check
          %p124 = pneg %p80
        $region18: #{upsample.1} parent=11 // pred_check_branch
          %126 = sbr.rel (%p124) target = $region20
        $region19: #{upsample.1} parent=11 // pred_region
          _
        $region20: #{upsample.1} parent=11 // pred_fallthru
          _
      $region12: #{upsample.1} parent=5 // pred_fallthru
        _
      %p127 = scmp.lt.s32.totalorder %s12, 4
      // Predicated region
      $region21: #{upsample.1} parent=5 // pred_check
        %p128 = pneg %p127
      $region22: #{upsample.1} parent=5 // pred_check_branch
        %130 = sbr.rel (%p128) target = $region24
      $region23: #{upsample.1} parent=5 // pred_region
        // Predicated region
        $region25: #{upsample.1} parent=23 // pred_check
          %p131 = pneg %p32
        $region26: #{upsample.1} parent=23 // pred_check_branch
          %133 = sbr.rel (%p131) target = $region28
        $region27: #{upsample.1} parent=23 // pred_region
          %s134 = sand.u32 %s22, 1
          %s135 = scalar_lea.sflag [#allocation4], %s134
          %s136 = sand.u32 %s22, 1
          %s137 = smul.addr %s136, 32
          %s138 = scalar_lea.vmem [#allocation3], %s137
          %s139 = smul.u32 2, %s12
          %141 = vsyncadd %s135, 0
          %s142 = smul.addr %s139, 2
          %s143 = smul.addr %s142, 8
          %s144 = scalar_lea.hbm %s0, %s143
          %s145 = sshll.u32 %s144, 4
          %s146 = int_to_ptr.hbm [resolvable:$true] %s145
          %s147 = sshll.u32 %s138, 4
          %s148 = int_to_ptr.vmem [resolvable:$true] %s147
          %153 = dma.hbm_to_vmem [thread:$0]  %s146, 512, %s148, %s135, 128, 128, 8
        $region28: #{upsample.1} parent=23 // pred_fallthru
          _
      $region24: #{upsample.1} parent=5 // pred_fallthru
        _
      %p154 = scmp.le.s32.totalorder 1, %s12
      %p155 = scmp.lt.s32.totalorder %s12, 5
      %p156 = pnand %p154, %p155
      %p157 = pneg %p156
      // Predicated region
      $region29: #{upsample.1} parent=5 // pred_check
        _
      $region30: #{upsample.1} parent=5 // pred_check_branch
        %159 = sbr.rel (%p156) target = $region32
      $region31: #{upsample.1} parent=5 // pred_region
        %s160 = ssub.s32 %s12, 1
        %s161 = sand.u32 %s25, 1
        %s162 = scalar_lea.sflag [#allocation4], %s161
        %s163 = sand.u32 %s25, 1
        %s164 = smul.addr %s163, 32
        %s165 = scalar_lea.vmem [#allocation3], %s164
        // Predicated region
        $region33: #{upsample.1} parent=31 // pred_check
          %p166 = pneg %p38
        $region34: #{upsample.1} parent=31 // pred_check_branch
          %168 = sbr.rel (%p166) target = $region36
        $region35: #{upsample.1} parent=31 // pred_region
          %170 = dma.done %s162, 512
        $region36: #{upsample.1} parent=31 // pred_fallthru
          _
        %s171 = sand.u32 %s25, 1
        %s172 = scalar_lea.sflag [#allocation4], %s171
        %s173 = sand.u32 %s25, 1
        %s174 = smul.addr %s173, 32
        %s175 = scalar_lea.vmem [#allocation3], %s174
        %p176 = pneg %p38
        %p177 = pneg %p35
        %p178 = pneg %p59
        %p179 = pneg %p56
        %p180 = pneg %p80
        %p181 = pneg %p77
        %p182 = pneg %p106
        %p183 = pneg %p103
        %s184 = smul.u32 2, %s17
        %p185 = scmp.lt.s32.totalorder %s184, 7
        %s186 = scalar_select %p185, %s184, 7
        %s187 = smul.addr %s186, 2
        %s188 = smul.addr %s187, 8
        %s189 = scalar_lea.vmem %s3, %s188
        %s190 = smul.u32 2, %s17
        %s191 = smul.u32 2, %s17
        %p192 = scmp.lt.s32.totalorder %s191, 7
        %s193 = scalar_select %p192, %s191, 7
        %s194 = smul.addr %s193, 2
        %s195 = smul.addr %s194, 8
        %s196 = scalar_lea.vmem %s3, %s195
        %s197 = smul.u32 2, %s17
        %v198 = vld [vmem:[%s1] sm:$0xff]
        %v199 = vld [vmem:[%s1 + $0x8] sm:$0xff]
        %v200 = vld [vmem:[%s165] sm:$0xff]
        %v201 = vld [vmem:[%s165 + $0x8] sm:$0xff]
        %v202 = vld [vmem:[%s165 + $0x10] sm:$0xff]
        %v203 = vld [vmem:[%s165 + $0x18] sm:$0xff]
        %vm204 = vcmask 130048
        %v206 = vsel %vm204, %v200, 0
        %v209 = vsel %vm204, %v201, 0
        %v212 = vsel %vm204, %v202, 0
        %v215 = vsel %vm204, %v203, 0
        %217 = vmatpush.msra.mxu0 0.0
        %218 = vmatpush.msra.mxu0 0.0
        %219 = vmatpush.msra.mxu0 0.0
        %220 = vmatpush.msra.mxu0 0.0
        %221 = vmatpush.msra.mxu0 0.0
        %222 = vmatpush.msra.mxu0 0.0
        %223 = vmatpush.msra.mxu0 0.0
        %224 = vmatpush.msra.mxu0 0.0
        %225 = vmatpush.msra.mxu0 0.0
        %226 = vmatpush.msra.mxu0 0.0
        %227 = vmatpush.msra.mxu0 0.0
        %228 = vmatpush.msra.mxu0 0.0
        %229 = vmatpush.msra.mxu0 0.0
        %230 = vmatpush.msra.mxu0 0.0
        %231 = vmatpush.msra.mxu0 %v199
        %232 = vmatpush.msra.mxu0 %v198
        %233 = vmatmul.f32.gmra.mxu0 %v206
        %v234 = vpop.f32.mrf.mxu0
        %v235 = vadd.f32 0.0, %v234
        %236 = vmatmul.f32.gmra.mxu0 %v209
        %v237 = vpop.f32.mrf.mxu0
        %v238 = vadd.f32 0.0, %v237
        %239 = vmatmul.f32.gmra.mxu0 %v212
        %v240 = vpop.f32.mrf.mxu0
        %v241 = vadd.f32 0.0, %v240
        %242 = vmatmul.f32.gmra.mxu0 %v215
        %v243 = vpop.f32.mrf.mxu0
        %v244 = vadd.f32 0.0, %v243
        %245 = vdwg.mxu0
        %vm246 = vcmask 261120
        %247 = vst.msk [vmem:[#allocation2] sm:$0xff] %vm246, %v235
        %248 = vst.msk [vmem:[#allocation2 + $0x8] sm:$0xff] %vm246, %v238
        %249 = vst.msk [vmem:[#allocation2 + $0x10] sm:$0xff] %vm246, %v241
        %250 = vst.msk [vmem:[#allocation2 + $0x18] sm:$0xff] %vm246, %v244
        loop: start=0, step=1, limit=2
        $region37: #{upsample.1} parent=31 // loop_pre_header
          _
        $region38: #{upsample.1} parent=31 // loop_header
          %s252 = sphi 0, %s256
          %p253 = scmp.ge.s32.totalorder %s252, 2
        $region39: #{upsample.1} parent=31 // loop_header_branch
          %255 = sbr.rel (%p253) target = $region43
        $region40: #{upsample.1} parent=31 // loop_body
          %s257 = smul.u32 %s252, 16
          %s258 = scalar_lea.vmem [#allocation2], %s257
          %v259 = vld [vmem:[%s258] sm:$0xff]
          %v260 = vld [vmem:[%s258 + $0x8] sm:$0xff]
          %v261 = vld [vmem:[%s2] sm:$0xff]
          %v262 = vld [vmem:[%s2 + $0x8] sm:$0xff]
          %v264 = vsel %vm204, %v261, 0
          %v267 = vsel %vm204, %v262, 0
          %269 = vmatpush.msra.mxu0 0.0
          %270 = vmatpush.msra.mxu0 0.0
          %271 = vmatpush.msra.mxu0 0.0
          %272 = vmatpush.msra.mxu0 0.0
          %273 = vmatpush.msra.mxu0 0.0
          %274 = vmatpush.msra.mxu0 0.0
          %275 = vmatpush.msra.mxu0 0.0
          %276 = vmatpush.msra.mxu0 0.0
          %277 = vmatpush.msra.mxu0 0.0
          %278 = vmatpush.msra.mxu0 0.0
          %279 = vmatpush.msra.mxu0 0.0
          %280 = vmatpush.msra.mxu0 0.0
          %281 = vmatpush.msra.mxu0 0.0
          %282 = vmatpush.msra.mxu0 0.0
          %283 = vmatpush.msra.mxu0 %v260
          %284 = vmatpush.msra.mxu0 %v259
          %285 = vmatmul.f32.gmra.mxu0 %v264
          %v286 = vpop.f32.mrf.mxu0
          %v287 = vadd.f32 0.0, %v286
          %288 = vmatmul.f32.gmra.mxu0 %v267
          %v289 = vpop.f32.mrf.mxu0
          %v290 = vadd.f32 0.0, %v289
          %291 = vdwg.mxu0
          %s292 = scalar_lea.vmem %s2, 16
          %v293 = vld [vmem:[%s292] sm:$0xff]
          %v294 = vld [vmem:[%s292 + $0x8] sm:$0xff]
          %v296 = vsel %vm204, %v293, 0
          %v299 = vsel %vm204, %v294, 0
          %301 = vmatpush.msra.mxu0 0.0
          %302 = vmatpush.msra.mxu0 0.0
          %303 = vmatpush.msra.mxu0 0.0
          %304 = vmatpush.msra.mxu0 0.0
          %305 = vmatpush.msra.mxu0 0.0
          %306 = vmatpush.msra.mxu0 0.0
          %307 = vmatpush.msra.mxu0 0.0
          %308 = vmatpush.msra.mxu0 0.0
          %309 = vmatpush.msra.mxu0 0.0
          %310 = vmatpush.msra.mxu0 0.0
          %311 = vmatpush.msra.mxu0 0.0
          %312 = vmatpush.msra.mxu0 0.0
          %313 = vmatpush.msra.mxu0 0.0
          %314 = vmatpush.msra.mxu0 0.0
          %315 = vmatpush.msra.mxu0 %v260
          %316 = vmatpush.msra.mxu0 %v259
          %317 = vmatmul.f32.gmra.mxu0 %v296
          %v318 = vpop.f32.mrf.mxu0
          %v319 = vadd.f32 0.0, %v318
          %320 = vmatmul.f32.gmra.mxu0 %v299
          %v321 = vpop.f32.mrf.mxu0
          %v322 = vadd.f32 0.0, %v321
          %323 = vdwg.mxu0
          %326 = vrot.lane.b32.xlu0 %v319, 32
          %v327 = vpop.permute.xlu0 %326
          %328 = vrot.lane.b32.xlu0 %v322, 32
          %v329 = vpop.permute.xlu0 %328
          %v332 = vsel %vm246, %v287, %v327
          %v333 = vsel %vm246, %v290, %v329
          %s334 = scalar_lea.vmem %s196, %s257
          %vm335 = vcmask 523264
          %336 = vst.msk [vmem:[%s334] sm:$0xff] %vm335, %v332
          %337 = vst.msk [vmem:[%s334 + $0x8] sm:$0xff] %vm335, %v333
        $region41: #{upsample.1} parent=31 // loop_footer
          %s256 = sadd.s32 1, %s252
        $region42: #{upsample.1} parent=31 // loop_footer_branch
          %251 = sbr.rel target = $region38
        $region43: #{upsample.1} parent=31 // loop_exit
          _
        %s338 = smul.u32 2, %s17
        %p339 = scmp.lt.s32.totalorder %s338, 7
        %s340 = scalar_select %p339, %s338, 7
        %s341 = smul.addr %s340, 2
        %s342 = smul.addr %s341, 8
        %s343 = scalar_lea.vmem %s3, %s342
        // Predicated region
        $region44: #{upsample.1} parent=31 // pred_check
          %p344 = pneg %p103
        $region45: #{upsample.1} parent=31 // pred_check_branch
          %346 = sbr.rel (%p344) target = $region47
        $region46: #{upsample.1} parent=31 // pred_region
          %s347 = smul.u32 2, %s17
        $region47: #{upsample.1} parent=31 // pred_fallthru
          _
      $region32: #{upsample.1} parent=5 // pred_fallthru
        _
      %p348 = scmp.le.s32.totalorder 2, %s12
      // Predicated region
      $region48: #{upsample.1} parent=5 // pred_check
        %p349 = pneg %p348
      $region49: #{upsample.1} parent=5 // pred_check_branch
        %351 = sbr.rel (%p349) target = $region51
      $region50: #{upsample.1} parent=5 // pred_region
        %s352 = ssub.s32 %s12, 2
        // Predicated region
        $region52: #{upsample.1} parent=50 // pred_check
          %p353 = pneg %p109
        $region53: #{upsample.1} parent=50 // pred_check_branch
          %355 = sbr.rel (%p353) target = $region55
        $region54: #{upsample.1} parent=50 // pred_region
          %s356 = smul.u32 2, %s18
          %p357 = scmp.lt.s32.totalorder %s356, 7
          %s358 = scalar_select %p357, %s356, 7
          %s359 = smul.addr %s358, 2
          %s360 = smul.addr %s359, 8
          %s361 = scalar_lea.vmem %s3, %s360
        $region55: #{upsample.1} parent=50 // pred_fallthru
          _
      $region51: #{upsample.1} parent=5 // pred_fallthru
        _
    $region6: #{upsample.1} parent=1 // loop_footer
      %s16 = sadd.s32 1, %s12
    $region7: #{upsample.1} parent=1 // loop_footer_branch
      %11 = sbr.rel target = $region3
    $region8: #{upsample.1} parent=1 // loop_exit
      _
    %362 = vsyncpa [#allocation4], 1
    %s363 = scalar_lea.sflag [#allocation4], 1
    %364 = vsyncpa %s363, 1

</llo_original>
